<compile_context>
chip_gen: v6e
topology: v6e:2x2x1
jax: 0.10.0
libtpu: 0.0.40
codegen_flags: <defaults>
</compile_context>

<pallas_src>
import jax
import jax.numpy as jnp
from jax.experimental import pallas as pl
from jax.experimental.pallas import tpu as pltpu


# -----------------------------------------------------------------------------
# Pallas kernel: (TM, KKCp) @ (KKCp, Coutp) + bias -> ReLU -> bf16 store
# -----------------------------------------------------------------------------
def _matmul_bias_relu_kernel(p_ref, w_ref, b_ref, o_ref):
    """p_ref: (1, TM, KKCp) bf16   patches tile
       w_ref: (KKCp, Coutp) bf16   BN-folded, zero-padded weights (resident)
       b_ref: (1, Coutp)    f32    BN-folded bias (resident)
       o_ref: (1, TM, Coutp) bf16  output tile (lane-dense, unmasked stores)"""
    acc = jnp.dot(p_ref[0], w_ref[...], preferred_element_type=jnp.float32)
    y = jnp.maximum(acc + b_ref[...], 0.0)          # f32 epilogue (v5e-safe)
    o_ref[0] = y.astype(o_ref.dtype)


# -----------------------------------------------------------------------------
# Helpers
# -----------------------------------------------------------------------------
def _round_up(x, m):
    return (x + m - 1) // m * m


def _pick_tile_m(m, cout_pad, target_bytes=1 << 20):
    """Largest spatial tile whose f32 accumulator is ~target_bytes.

    Prefers multiples of 256 (MXU M cadence), falls back to multiples of 8.
    """
    cap = max(8, target_bytes // (cout_pad * 4))
    if m <= cap:
        return _round_up(m, 8)
    tm = (cap // 256) * 256
    if tm == 0:
        tm = (cap // 8) * 8
    return int(max(8, tm))


# -----------------------------------------------------------------------------
# Wrapper (NCHW in / NCHW out, matching the PyTorch module)
# -----------------------------------------------------------------------------
def basic_conv2d(x_nchw, w_oihw, gamma=None, beta=None, running_mean=None,
                 running_var=None, *, stride=1, padding=0, dilation=1,
                 eps=1e-5, batch_norm=True):
    N, Cin, H, W = x_nchw.shape
    Cout, Cin_w, Kh, Kw = w_oihw.shape
    assert Cin_w == Cin, "groups != 1 not supported"
    assert isinstance(stride, int) and isinstance(padding, int) \
        and isinstance(dilation, int), "only int stride/padding/dilation"

    # --- fold eval-mode BatchNorm into the bias-free conv --------------------
    if batch_norm:
        scale = gamma / jnp.sqrt(running_var + eps)
        bias = beta - running_mean * scale
    else:
        scale = jnp.ones((Cout,), jnp.float32)
        bias = jnp.zeros((Cout,), jnp.float32)

    # --- im2col in XLA: NCHW -> NHWC, pad, gather Kh*Kw taps ------------------
    x = jnp.transpose(x_nchw, (0, 2, 3, 1)).astype(jnp.float32)
    xp = jnp.pad(x, ((0, 0), (padding, padding), (padding, padding), (0, 0)))
    Hp, Wp = H + 2 * padding, W + 2 * padding
    H_out = (Hp - dilation * (Kh - 1) - 1) // stride + 1
    W_out = (Wp - dilation * (Kw - 1) - 1) // stride + 1

    taps = []
    for dy in range(Kh):
        for dx in range(Kw):
            y0, x0 = dy * dilation, dx * dilation
            taps.append(xp[:, y0:y0 + (H_out - 1) * stride + 1:stride,
                           x0:x0 + (W_out - 1) * stride + 1:stride, :])
    # column order [dy][dx][cin] matches the HWIO weight reshape below
    patches = jnp.concatenate(taps, axis=-1)        # (N, H_out, W_out, Kh*Kw*Cin)

    KKC = Kh * Kw * Cin
    M = H_out * W_out

    # --- fold BN into weights; zero-pad to native 128-wide MXU tiles ----------
    w_hwio = jnp.transpose(w_oihw, (2, 3, 1, 0)).astype(jnp.float32)
    w_folded = (w_hwio * scale[None, None, None, :]).reshape(KKC, Cout)

    KKCp = _round_up(KKC, 128)
    Coutp = _round_up(Cout, 128)

    w_bf16 = jnp.pad(w_folded, ((0, KKCp - KKC), (0, Coutp - Cout))
                     ).astype(jnp.bfloat16)
    b_f32 = jnp.pad(bias, (0, Coutp - Cout)).reshape(1, Coutp
                                                     ).astype(jnp.float32)

    # --- spatial tiling over flattened H_out*W_out (padded, never collapses) --
    TM = _pick_tile_m(M, Coutp)
    Mp = _round_up(M, TM)

    p_flat = patches.reshape(N, M, KKC).astype(jnp.bfloat16)
    p_pad = jnp.pad(p_flat, ((0, 0), (0, Mp - M), (0, KKCp - KKC)))

    grid = (N, Mp // TM)
    # v7x megacore: shard on batch when possible; shard tiles only when N == 1.
    dim_sem = ("parallel", "arbitrary") if N > 1 else ("arbitrary", "parallel")

    # Explicit scoped-VMEM budget (v5e default is only 16 MiB; v7x has 64 MiB).
    vmem_est = (2 * TM * KKCp * 2 + 2 * KKCp * Coutp * 2 + 2 * Coutp * 4
                + 2 * TM * Coutp * 2 + TM * Coutp * 4)
    vmem_limit = int(min(max(2 * vmem_est + (8 << 20), 32 << 20), 48 << 20))

    out = pl.pallas_call(
        _matmul_bias_relu_kernel,
        out_shape=jax.ShapeDtypeStruct((N, Mp, Coutp), jnp.bfloat16),
        grid=grid,
        in_specs=[
            pl.BlockSpec((1, TM, KKCp), lambda n, t: (n, t, 0)),
            pl.BlockSpec((KKCp, Coutp), lambda n, t: (0, 0)),   # resident
            pl.BlockSpec((1, Coutp), lambda n, t: (0, 0)),      # resident
        ],
        out_specs=pl.BlockSpec((1, TM, Coutp), lambda n, t: (n, t, 0)),
        compiler_params=pltpu.CompilerParams(
            dimension_semantics=dim_sem,
            vmem_limit_bytes=vmem_limit),
    )(p_pad, w_bf16, b_f32)

    # slice off padding, NHWC -> NCHW (in bf16, cheaper), upcast to f32 last
    out = out[:, :M, :Cout].reshape(N, H_out, W_out, Cout)
    return jnp.transpose(out, (0, 3, 1, 2)).astype(jnp.float32)


# -----------------------------------------------------------------------------
# Pure-JAX reference (f32) for correctness check
# -----------------------------------------------------------------------------
def _ref_basic_conv2d(x_nchw, w_oihw, gamma, beta, mean, var, *, padding,
                      stride=1, dilation=1, eps=1e-5):
    y = jax.lax.conv_general_dilated(
        x_nchw.astype(jnp.float32), w_oihw.astype(jnp.float32),
        window_strides=(stride, stride), padding=[(padding, padding)] * 2,
        rhs_dilation=(dilation, dilation),
        dimension_numbers=("NCHW", "OIHW", "NCHW"))
    scale = gamma / jnp.sqrt(var + eps)
    bias = beta - mean * scale
    y = y * scale[None, :, None, None] + bias[None, :, None, None]
    return jax.nn.relu(y)


# -----------------------------------------------------------------------------
if __name__ == "__main__":
    key = jax.random.PRNGKey(0)
    kx, kw, kg, kb, km, kv = jax.random.split(key, 6)

    N, Cin, H, W = 2, 4, 16, 16
    Cout, K, padding = 64, 3, 1          # typical BasicConv2d config (3x3, pad 1)

    x = jax.random.normal(kx, (N, Cin, H, W), jnp.float32)
    w = jax.random.normal(kw, (Cout, Cin, K, K), jnp.float32) * 0.05
    gamma = 1.0 + 0.1 * jax.random.normal(kg, (Cout,), jnp.float32)
    beta = 0.1 * jax.random.normal(kb, (Cout,), jnp.float32)
    running_mean = 0.1 * jax.random.normal(km, (Cout,), jnp.float32)
    running_var = jnp.abs(1.0 + 0.1 * jax.random.normal(kv, (Cout,), jnp.float32))

    out = basic_conv2d(x, w, gamma, beta, running_mean, running_var,
                       padding=padding)
    out = jax.block_until_ready(out)
    assert out.shape == (N, Cout, H, W), out.shape

    ref = jax.block_until_ready(
        _ref_basic_conv2d(x, w, gamma, beta, running_mean, running_var,
                          padding=padding))
    max_err = float(jnp.max(jnp.abs(out - ref)))
    # bf16 matmul operands vs. f32 reference -> loosened tolerance.
    assert jnp.allclose(out, ref, atol=2e-2, rtol=2e-2), max_err

    print("KERNEL_OK")
</pallas_src>

<mosaic_0001>
module attributes {stable_mosaic.version = 11 : i64} {
  func.func @_matmul_bias_relu_kernel(%arg0: i32, %arg1: i32, %arg2: memref<1x256x128xbf16, #tpu.memory_space<vmem>>, %arg3: memref<128x128xbf16, #tpu.memory_space<vmem>>, %arg4: memref<1x128xf32, #tpu.memory_space<vmem>>, %arg5: memref<1x256x128xbf16, #tpu.memory_space<vmem>>) attributes {dimension_semantics = [#tpu.dimension_semantics<parallel>, #tpu.dimension_semantics<arbitrary>], iteration_bounds = array<i64: 2, 1>, scalar_prefetch = 0 : i64, scratch_operands = 0 : i64, tpu.core_type = #tpu.core_type<tc>, window_params = [{transform_indices = @transform_0, window_bounds = array<i64: 1, 256, 128>}, {pipeline_mode = #tpu.pipeline_mode<synchronous>, transform_indices = @transform_1, window_bounds = array<i64: 128, 128>}, {pipeline_mode = #tpu.pipeline_mode<synchronous>, transform_indices = @transform_2, window_bounds = array<i64: 1, 128>}, {transform_indices = @transform_3, window_bounds = array<i64: 1, 256, 128>}]} {
    %c0 = arith.constant 0 : index
    %c0_0 = arith.constant 0 : index
    %c0_1 = arith.constant 0 : index
    %0 = vector.load %arg2[%c0, %c0_0, %c0_1] : memref<1x256x128xbf16, #tpu.memory_space<vmem>>, vector<1x256x128xbf16>
    %1 = vector.shape_cast %0 : vector<1x256x128xbf16> to vector<256x128xbf16>
    %c0_2 = arith.constant 0 : index
    %c0_3 = arith.constant 0 : index
    %2 = vector.load %arg3[%c0_2, %c0_3] : memref<128x128xbf16, #tpu.memory_space<vmem>>, vector<128x128xbf16>
    %cst = arith.constant dense<0.000000e+00> : vector<256x128xf32>
    %3 = tpu.matmul %1, %2, %cst {dimension_numbers = #tpu.dot_dimension_numbers<[1], [0], [0], [1], [0, 0, 1, 1], [], []>} : vector<256x128xbf16>, vector<128x128xbf16>, vector<256x128xf32> -> vector<256x128xf32>
    %c0_4 = arith.constant 0 : index
    %c0_5 = arith.constant 0 : index
    %4 = vector.load %arg4[%c0_4, %c0_5] : memref<1x128xf32, #tpu.memory_space<vmem>>, vector<1x128xf32>
    %5 = vector.broadcast %4 : vector<1x128xf32> to vector<256x128xf32>
    %6 = arith.addf %3, %5 : vector<256x128xf32>
    %cst_6 = arith.constant 0.000000e+00 : f32
    %7 = vector.broadcast %cst_6 : f32 to vector<256x128xf32>
    %8 = arith.maximumf %6, %7 : vector<256x128xf32>
    %9 = arith.truncf %8 : vector<256x128xf32> to vector<256x128xbf16>
    %c0_7 = arith.constant 0 : index
    %c0_8 = arith.constant 0 : index
    %c0_9 = arith.constant 0 : index
    %10 = vector.load %arg5[%c0_7, %c0_8, %c0_9] : memref<1x256x128xbf16, #tpu.memory_space<vmem>>, vector<1x256x128xbf16>
    %11 = vector.shape_cast %10 : vector<1x256x128xbf16> to vector<256x128xbf16>
    %12 = vector.shape_cast %9 : vector<256x128xbf16> to vector<1x256x128xbf16>
    tpu.vector_store %arg5[%c0_7, %c0_8, %c0_9], %12 {strides = array<i32>} : memref<1x256x128xbf16, #tpu.memory_space<vmem>>, vector<1x256x128xbf16>,
    return
  }
  func.func @transform_0(%arg0: i32, %arg1: i32) -> (i32, i32, i32) {
    %c0_i32 = arith.constant 0 : i32
    %c0_i32_0 = arith.constant 0 : i32
    return %arg0, %arg1, %c0_i32 : i32, i32, i32
  }
  func.func @transform_1(%arg0: i32, %arg1: i32) -> (i32, i32) {
    %c0_i32 = arith.constant 0 : i32
    %c0_i32_0 = arith.constant 0 : i32
    %c0_i32_1 = arith.constant 0 : i32
    return %c0_i32, %c0_i32_0 : i32, i32
  }
  func.func @transform_2(%arg0: i32, %arg1: i32) -> (i32, i32) {
    %c0_i32 = arith.constant 0 : i32
    %c0_i32_0 = arith.constant 0 : i32
    %c0_i32_1 = arith.constant 0 : i32
    return %c0_i32, %c0_i32_0 : i32, i32
  }
  func.func @transform_3(%arg0: i32, %arg1: i32) -> (i32, i32, i32) {
    %c0_i32 = arith.constant 0 : i32
    %c0_i32_0 = arith.constant 0 : i32
    return %arg0, %arg1, %c0_i32 : i32, i32, i32
  }
}

</mosaic_0001>

<llo_original>
// kernel: tpu_custom_call.1
$region0: #{tpu_custom_call.1}
  #allocation0 [shape = 'u32[]', space=smem, size = 0x4, offset = 0x4, fixed_abs, tag = 'smem constant byte address 0x4 - core index']
  #allocation1 [shape = 'u32[144,128]{1,0:T(1,128)}', space=vmem, size = 0x12000, scoped, tag = 'internal scratch']
  %s0 = inlined_call_operand.hbm [shape: bf16[2,256,128], index: 0, kind: input, shape index: {}]
  %s1 = inlined_call_operand.hbm [shape: bf16[128,128], index: 1, kind: input, shape index: {}]
  %s2 = inlined_call_operand.vmem [shape: f32[1,128], index: 2, kind: input, shape index: {}]
  %s3 = inlined_call_operand.hbm [shape: bf16[2,256,128], index: 3, kind: output, shape index: {}]
  %s4 = sld [smem:[#allocation0]]
  $region53: #{tpu_custom_call.1} parent=0
    _
  %s6 = ssub.s32 1, %s4
  %s7 = scalar_select 0, %s6, %s4
  $region1: #{tpu_custom_call.1} parent=0
    #allocation2 [shape = 'u8[131072]{0}', space=vmem, size = 0x20000, scoped, tag = 'input window, operand 0']
    #allocation3 [shape = 's32[2]{0}', space=sflag, size = 0x8, scoped, tag = 'scoped memory for tpu_custom_call.1']
    #allocation4 [shape = 's32[2]{0}', space=sflag, size = 0x8, scoped, tag = 'scoped memory for tpu_custom_call.1']
    #allocation5 [shape = 'u8[32768]{0}', space=vmem, size = 0x8000, scoped, tag = 'input window, operand 1, single buffered']
    #allocation6 [shape = 's32[1]{0}', space=sflag, size = 0x4, scoped, tag = 'scoped memory for tpu_custom_call.1']
    #allocation7 [shape = 'u8[131072]{0}', space=vmem, size = 0x20000, scoped, tag = 'output window, operand 0']
    %8 = vsyncpa [#allocation3], 0
    %s9 = scalar_lea.sflag [#allocation3], 1
    %10 = vsyncpa %s9, 0
    %11 = vsyncpa [#allocation6], 0
    %12 = vsyncpa [#allocation4], 0
    %s13 = scalar_lea.sflag [#allocation4], 1
    %14 = vsyncpa %s13, 0
    loop: start=0, step=1, limit=4
    $region2: #{tpu_custom_call.1} parent=1 // loop_pre_header
      _
    $region3: #{tpu_custom_call.1} parent=1 // loop_header
      %s16 = sphi 0, %s20
      %p17 = scmp.ge.s32.totalorder %s16, 4
      %s23 = sphi 0, %s35
      %s24 = sphi 0, %s31
      %s25 = sphi 0, %s23
      %s26 = sphi 0, %s24
      %s27 = sphi 0, %s25
      %s28 = sphi 0, %s26
      %s40 = sphi 0, %s42
      %s43 = sphi 0, %s40
      %s44 = sphi 0, %s43
      %s60 = sphi 0, %s44
      %s64 = sphi 0, %s64
      %s66 = sphi 0, %s64
      %s67 = sphi 0, %s66
      %s81 = sphi 0, %s67
      %s85 = sphi 0, %s85
      %s87 = sphi 0, %s85
      %s88 = sphi 0, %s87
      %s102 = sphi 0, %s88
      %s110 = sphi 0, %s112
      %s113 = sphi 0, %s110
      %s114 = sphi 0, %s113
      %s130 = sphi 0, %s114
    $region4: #{tpu_custom_call.1} parent=1 // loop_header_branch
      %19 = sbr.rel (%p17) target = $region8
    $region5: #{tpu_custom_call.1} parent=1 // loop_body
      %s21 = ssub.s32 %s16, 1
      %s22 = ssub.s32 %s16, 2
      %s29 = sadd.s32 1, %s24
      %p30 = scmp.ge.s32.totalorder %s29, 1
      %s31 = scalar_select %p30, 0, %s29
      %s32 = sadd.s32 1, %s23
      %s33 = scalar_select %p30, %s32, %s23
      %p34 = scmp.ge.s32.totalorder %s33, 2
      %s35 = scalar_select %p34, 0, %s33
      %s36 = ssub.s32 %s23, %s35
      %s37 = ssub.s32 %s24, %s31
      %s38 = sor.u32 %s36, %s37
      %p39 = scmp.eq.s32.totalorder %s38, 0
      %s41 = sadd.s32 %s40, 1
      %s42 = scalar_select %p39, %s40, %s41
      %p45 = pneg %p39
      %p46 = scmp.eq.s32.totalorder %s16, 1
      %p47 = por %p45, %p46
      %p48 = scmp.ne.s32.totalorder %s40, %s43
      %p49 = scmp.eq.s32.totalorder %s16, 0
      %p50 = por %p48, %p49
      %p51 = scmp.ne.s32.totalorder %s40, %s43
      %p52 = scmp.eq.s32.totalorder %s21, 1
      %p53 = por %p51, %p52
      %p54 = scmp.ne.s32.totalorder %s43, %s44
      %p55 = scmp.eq.s32.totalorder %s21, 0
      %p56 = por %p54, %p55
      %p57 = scmp.ne.s32.totalorder %s43, %s44
      %p58 = scmp.eq.s32.totalorder %s22, 1
      %p59 = por %p57, %p58
      %p61 = scmp.ne.s32.totalorder %s44, %s60
      %p62 = scmp.eq.s32.totalorder %s22, 0
      %p63 = por %p61, %p62
      %s65 = sadd.s32 %s64, 1
      %p68 = scmp.eq.s32.totalorder %s16, 1
      %p69 = scmp.ne.s32.totalorder %s64, %s66
      %p70 = scmp.eq.s32.totalorder %s16, 0
      %p71 = por %p69, %p70
      %p72 = scmp.ne.s32.totalorder %s64, %s66
      %p73 = scmp.eq.s32.totalorder %s21, 1
      %p74 = por %p72, %p73
      %p75 = scmp.ne.s32.totalorder %s66, %s67
      %p76 = scmp.eq.s32.totalorder %s21, 0
      %p77 = por %p75, %p76
      %p78 = scmp.ne.s32.totalorder %s66, %s67
      %p79 = scmp.eq.s32.totalorder %s22, 1
      %p80 = por %p78, %p79
      %p82 = scmp.ne.s32.totalorder %s67, %s81
      %p83 = scmp.eq.s32.totalorder %s22, 0
      %p84 = por %p82, %p83
      %s86 = sadd.s32 %s85, 1
      %p89 = scmp.eq.s32.totalorder %s16, 1
      %p90 = scmp.ne.s32.totalorder %s85, %s87
      %p91 = scmp.eq.s32.totalorder %s16, 0
      %p92 = por %p90, %p91
      %p93 = scmp.ne.s32.totalorder %s85, %s87
      %p94 = scmp.eq.s32.totalorder %s21, 1
      %p95 = por %p93, %p94
      %p96 = scmp.ne.s32.totalorder %s87, %s88
      %p97 = scmp.eq.s32.totalorder %s21, 0
      %p98 = por %p96, %p97
      %p99 = scmp.ne.s32.totalorder %s87, %s88
      %p100 = scmp.eq.s32.totalorder %s22, 1
      %p101 = por %p99, %p100
      %p103 = scmp.ne.s32.totalorder %s88, %s102
      %p104 = scmp.eq.s32.totalorder %s22, 0
      %p105 = por %p103, %p104
      %s106 = ssub.s32 %s23, %s35
      %s107 = ssub.s32 %s24, %s31
      %s108 = sor.u32 %s106, %s107
      %p109 = scmp.eq.s32.totalorder %s108, 0
      %s111 = sadd.s32 %s110, 1
      %s112 = scalar_select %p109, %s110, %s111
      %p115 = pneg %p109
      %p116 = scmp.eq.s32.totalorder %s16, 1
      %p117 = por %p115, %p116
      %p118 = scmp.ne.s32.totalorder %s110, %s113
      %p119 = scmp.eq.s32.totalorder %s16, 0
      %p120 = por %p118, %p119
      %p121 = scmp.ne.s32.totalorder %s110, %s113
      %p122 = scmp.eq.s32.totalorder %s21, 1
      %p123 = por %p121, %p122
      %p124 = scmp.ne.s32.totalorder %s113, %s114
      %p125 = scmp.eq.s32.totalorder %s21, 0
      %p126 = por %p124, %p125
      %p127 = scmp.ne.s32.totalorder %s113, %s114
      %p128 = scmp.eq.s32.totalorder %s22, 1
      %p129 = por %p127, %p128
      %p131 = scmp.ne.s32.totalorder %s114, %s130
      %p132 = scmp.eq.s32.totalorder %s22, 0
      %p133 = por %p131, %p132
      %p134 = scmp.le.s32.totalorder 1, %s16
      %p135 = scmp.lt.s32.totalorder %s16, 3
      %p136 = pnand %p134, %p135
      %p137 = pneg %p136
      // Predicated region
      $region9: #{tpu_custom_call.1} parent=5 // pred_check
        _
      $region10: #{tpu_custom_call.1} parent=5 // pred_check_branch
        %139 = sbr.rel (%p136) target = $region12
      $region11: #{tpu_custom_call.1} parent=5 // pred_region
        %s140 = ssub.s32 %s16, 1
        // Predicated region
        $region13: #{tpu_custom_call.1} parent=11 // pred_check
          %p141 = pneg %p77
        $region14: #{tpu_custom_call.1} parent=11 // pred_check_branch
          %143 = sbr.rel (%p141) target = $region16
        $region15: #{tpu_custom_call.1} parent=11 // pred_region
          %s145 = ssub.s32 1024, 1024
          %146 = vsyncadd [#allocation6], %s145
          %s147 = sshll.u32 [#allocation5], 4
          %s148 = int_to_ptr.vmem [resolvable:$true] %s147
          %153 = dma.hbm_to_vmem [thread:$0]  %s1, 1024, %s148, [#allocation6], 64, 64, 4
        $region16: #{tpu_custom_call.1} parent=11 // pred_fallthru
          _
        // Predicated region
        $region17: #{tpu_custom_call.1} parent=11 // pred_check
          %p154 = pneg %p98
        $region18: #{tpu_custom_call.1} parent=11 // pred_check_branch
          %156 = sbr.rel (%p154) target = $region20
        $region19: #{tpu_custom_call.1} parent=11 // pred_region
          _
        $region20: #{tpu_custom_call.1} parent=11 // pred_fallthru
          _
      $region12: #{tpu_custom_call.1} parent=5 // pred_fallthru
        _
      %p157 = scmp.lt.s32.totalorder %s16, 2
      // Predicated region
      $region21: #{tpu_custom_call.1} parent=5 // pred_check
        %p158 = pneg %p157
      $region22: #{tpu_custom_call.1} parent=5 // pred_check_branch
        %160 = sbr.rel (%p158) target = $region24
      $region23: #{tpu_custom_call.1} parent=5 // pred_region
        // Predicated region
        $region25: #{tpu_custom_call.1} parent=23 // pred_check
          %p161 = pneg %p50
        $region26: #{tpu_custom_call.1} parent=23 // pred_check_branch
          %163 = sbr.rel (%p161) target = $region28
        $region27: #{tpu_custom_call.1} parent=23 // pred_region
          %s164 = sand.u32 %s40, 1
          %s165 = scalar_lea.sflag [#allocation3], %s164
          %s166 = sand.u32 %s40, 1
          %s167 = smul.addr %s166, 128
          %s168 = scalar_lea.vmem [#allocation2], %s167
          %s169 = smul.u32 32, %s24
          %s171 = ssub.s32 2048, 2048
          %172 = vsyncadd %s165, %s171
          %s173 = smul.addr %s23, 32
          %s174 = sadd.s32 %s169, %s173
          %s175 = smul.addr %s174, 64
          %s176 = scalar_lea.hbm %s0, %s175
          %s177 = sshll.u32 %s168, 4
          %s178 = int_to_ptr.vmem [resolvable:$true] %s177
          %183 = dma.hbm_to_vmem [thread:$0]  %s176, 2048, %s178, %s165, 64, 64, 4
        $region28: #{tpu_custom_call.1} parent=23 // pred_fallthru
          _
      $region24: #{tpu_custom_call.1} parent=5 // pred_fallthru
        _
      %p184 = scmp.le.s32.totalorder 1, %s16
      %p185 = scmp.lt.s32.totalorder %s16, 3
      %p186 = pnand %p184, %p185
      %p187 = pneg %p186
      // Predicated region
      $region29: #{tpu_custom_call.1} parent=5 // pred_check
        _
      $region30: #{tpu_custom_call.1} parent=5 // pred_check_branch
        %189 = sbr.rel (%p186) target = $region32
      $region31: #{tpu_custom_call.1} parent=5 // pred_region
        %s190 = ssub.s32 %s16, 1
        %s191 = sand.u32 %s43, 1
        %s192 = scalar_lea.sflag [#allocation3], %s191
        %s193 = sand.u32 %s43, 1
        %s194 = smul.addr %s193, 128
        %s195 = scalar_lea.vmem [#allocation2], %s194
        // Predicated region
        $region33: #{tpu_custom_call.1} parent=31 // pred_check
          %p196 = pneg %p56
        $region34: #{tpu_custom_call.1} parent=31 // pred_check_branch
          %198 = sbr.rel (%p196) target = $region36
        $region35: #{tpu_custom_call.1} parent=31 // pred_region
          %199 = dma.done %s192, 2048
        $region36: #{tpu_custom_call.1} parent=31 // pred_fallthru
          _
        // Predicated region
        $region37: #{tpu_custom_call.1} parent=31 // pred_check
          %p200 = pneg %p77
        $region38: #{tpu_custom_call.1} parent=31 // pred_check_branch
          %202 = sbr.rel (%p200) target = $region40
        $region39: #{tpu_custom_call.1} parent=31 // pred_region
          %203 = dma.done [#allocation6], 1024
        $region40: #{tpu_custom_call.1} parent=31 // pred_fallthru
          _
        %s204 = sand.u32 %s43, 1
        %s205 = scalar_lea.sflag [#allocation3], %s204
        %s206 = sand.u32 %s43, 1
        %s207 = smul.addr %s206, 128
        %s208 = scalar_lea.vmem [#allocation2], %s207
        %p209 = pneg %p56
        %p210 = pneg %p53
        %p211 = pneg %p77
        %p212 = pneg %p74
        %p213 = pneg %p98
        %p214 = pneg %p95
        %p215 = pneg %p126
        %p216 = pneg %p123
        %s217 = sand.u32 %s113, 1
        %s218 = scalar_lea.sflag [#allocation4], %s217
        %s219 = sand.u32 %s113, 1
        %s220 = smul.addr %s219, 128
        %s221 = scalar_lea.vmem [#allocation7], %s220
        %s222 = smul.u32 32, %s26
        %s223 = smul.u32 32, %s26
        %v225 = vld [vmem:[%s195] sm:$0xf]
        %v226 = vld [vmem:[%s195 + $0x4] sm:$0xf]
        %v227 = vld [vmem:[%s195 + $0x8] sm:$0xf]
        %v228 = vld [vmem:[%s195 + $0xc] sm:$0xf]
        %v229 = vld [vmem:[%s195 + $0x10] sm:$0xf]
        %v230 = vld [vmem:[%s195 + $0x14] sm:$0xf]
        %v231 = vld [vmem:[%s195 + $0x18] sm:$0xf]
        %v232 = vld [vmem:[%s195 + $0x1c] sm:$0xf]
        %v233 = vld [vmem:[%s195 + $0x20] sm:$0xf]
        %v234 = vld [vmem:[%s195 + $0x24] sm:$0xf]
        %v235 = vld [vmem:[%s195 + $0x28] sm:$0xf]
        %v236 = vld [vmem:[%s195 + $0x2c] sm:$0xf]
        %v237 = vld [vmem:[%s195 + $0x30] sm:$0xf]
        %v238 = vld [vmem:[%s195 + $0x34] sm:$0xf]
        %v239 = vld [vmem:[%s195 + $0x38] sm:$0xf]
        %v240 = vld [vmem:[%s195 + $0x3c] sm:$0xf]
        %v241 = vld [vmem:[%s195 + $0x40] sm:$0xf]
        %v242 = vld [vmem:[%s195 + $0x44] sm:$0xf]
        %v243 = vld [vmem:[%s195 + $0x48] sm:$0xf]
        %v244 = vld [vmem:[%s195 + $0x4c] sm:$0xf]
        %v245 = vld [vmem:[%s195 + $0x50] sm:$0xf]
        %v246 = vld [vmem:[%s195 + $0x54] sm:$0xf]
        %v247 = vld [vmem:[%s195 + $0x58] sm:$0xf]
        %v248 = vld [vmem:[%s195 + $0x5c] sm:$0xf]
        %v249 = vld [vmem:[%s195 + $0x60] sm:$0xf]
        %v250 = vld [vmem:[%s195 + $0x64] sm:$0xf]
        %v251 = vld [vmem:[%s195 + $0x68] sm:$0xf]
        %v252 = vld [vmem:[%s195 + $0x6c] sm:$0xf]
        %v253 = vld [vmem:[%s195 + $0x70] sm:$0xf]
        %v254 = vld [vmem:[%s195 + $0x74] sm:$0xf]
        %v255 = vld [vmem:[%s195 + $0x78] sm:$0xf]
        %v256 = vld [vmem:[%s195 + $0x7c] sm:$0xf]
        %v257 = vld [vmem:[#allocation5] sm:$0xf]
        %v258 = vld [vmem:[#allocation5 + $0x4] sm:$0xf]
        %v259 = vld [vmem:[#allocation5 + $0x8] sm:$0xf]
        %v260 = vld [vmem:[#allocation5 + $0xc] sm:$0xf]
        %v261 = vld [vmem:[#allocation5 + $0x10] sm:$0xf]
        %v262 = vld [vmem:[#allocation5 + $0x14] sm:$0xf]
        %v263 = vld [vmem:[#allocation5 + $0x18] sm:$0xf]
        %v264 = vld [vmem:[#allocation5 + $0x1c] sm:$0xf]
        %v265 = vld [vmem:[#allocation5 + $0x20] sm:$0xf]
        %v266 = vld [vmem:[#allocation5 + $0x24] sm:$0xf]
        %v267 = vld [vmem:[#allocation5 + $0x28] sm:$0xf]
        %v268 = vld [vmem:[#allocation5 + $0x2c] sm:$0xf]
        %v269 = vld [vmem:[#allocation5 + $0x30] sm:$0xf]
        %v270 = vld [vmem:[#allocation5 + $0x34] sm:$0xf]
        %v271 = vld [vmem:[#allocation5 + $0x38] sm:$0xf]
        %v272 = vld [vmem:[#allocation5 + $0x3c] sm:$0xf]
        %v273 = vld [vmem:[%s2] sm:$0x1]
        %v275 = vlaneseq
        %v276 = vshrl.u32 %v275, 7
        %v277 = vsub.s32 0, %v276
        %v278 = vrot.slane %v273, %v277
        %v312 = vunpack.c.l.b16 %v225
        %v313 = vunpack.c.l.b16 %v226
        %v314 = vunpack.c.l.b16 %v227
        %v315 = vunpack.c.l.b16 %v228
        %v316 = vunpack.c.l.b16 %v229
        %v317 = vunpack.c.l.b16 %v230
        %v318 = vunpack.c.l.b16 %v231
        %v319 = vunpack.c.l.b16 %v232
        %v320 = vunpack.c.l.b16 %v233
        %v321 = vunpack.c.l.b16 %v234
        %v322 = vunpack.c.l.b16 %v235
        %v323 = vunpack.c.l.b16 %v236
        %v324 = vunpack.c.l.b16 %v237
        %v325 = vunpack.c.l.b16 %v238
        %v326 = vunpack.c.l.b16 %v239
        %v327 = vunpack.c.l.b16 %v240
        %v328 = vunpack.c.l.b16 %v241
        %v329 = vunpack.c.l.b16 %v242
        %v330 = vunpack.c.l.b16 %v243
        %v331 = vunpack.c.l.b16 %v244
        %v332 = vunpack.c.l.b16 %v245
        %v333 = vunpack.c.l.b16 %v246
        %v334 = vunpack.c.l.b16 %v247
        %v335 = vunpack.c.l.b16 %v248
        %v336 = vunpack.c.l.b16 %v249
        %v337 = vunpack.c.l.b16 %v250
        %v338 = vunpack.c.l.b16 %v251
        %v339 = vunpack.c.l.b16 %v252
        %v340 = vunpack.c.l.b16 %v253
        %v341 = vunpack.c.l.b16 %v254
        %v342 = vunpack.c.l.b16 %v255
        %v343 = vunpack.c.l.b16 %v256
        %v344 = vpack.c.b16 %v313, %v312
        %v345 = vpack.c.b16 %v315, %v314
        %v346 = vpack.c.b16 %v317, %v316
        %v347 = vpack.c.b16 %v319, %v318
        %v348 = vpack.c.b16 %v321, %v320
        %v349 = vpack.c.b16 %v323, %v322
        %v350 = vpack.c.b16 %v325, %v324
        %v351 = vpack.c.b16 %v327, %v326
        %v352 = vpack.c.b16 %v329, %v328
        %v353 = vpack.c.b16 %v331, %v330
        %v354 = vpack.c.b16 %v333, %v332
        %v355 = vpack.c.b16 %v335, %v334
        %v356 = vpack.c.b16 %v337, %v336
        %v357 = vpack.c.b16 %v339, %v338
        %v358 = vpack.c.b16 %v341, %v340
        %v359 = vpack.c.b16 %v343, %v342
        %v392 = vunpack.c.l.b16 %v257
        %v393 = vunpack.c.l.b16 %v258
        %v394 = vunpack.c.l.b16 %v259
        %v395 = vunpack.c.l.b16 %v260
        %v396 = vunpack.c.l.b16 %v261
        %v397 = vunpack.c.l.b16 %v262
        %v398 = vunpack.c.l.b16 %v263
        %v399 = vunpack.c.l.b16 %v264
        %v400 = vunpack.c.l.b16 %v265
        %v401 = vunpack.c.l.b16 %v266
        %v402 = vunpack.c.l.b16 %v267
        %v403 = vunpack.c.l.b16 %v268
        %v404 = vunpack.c.l.b16 %v269
        %v405 = vunpack.c.l.b16 %v270
        %v406 = vunpack.c.l.b16 %v271
        %v407 = vunpack.c.l.b16 %v272
        %v408 = vpack.c.b16 %v393, %v392
        %v409 = vpack.c.b16 %v395, %v394
        %v410 = vpack.c.b16 %v397, %v396
        %v411 = vpack.c.b16 %v399, %v398
        %v412 = vpack.c.b16 %v401, %v400
        %v413 = vpack.c.b16 %v403, %v402
        %v414 = vpack.c.b16 %v405, %v404
        %v415 = vpack.c.b16 %v407, %v406
        %424 = vmatprep.subr.bf16.mxu0 0
        %425 = vmatpush1.bf16.msra.mxu0 %v415
        %426 = vmatprep.subr.bf16.mxu0 0
        %427 = vmatpush1.bf16.msra.mxu0 %v414
        %428 = vmatprep.subr.bf16.mxu0 0
        %429 = vmatpush1.bf16.msra.mxu0 %v413
        %430 = vmatprep.subr.bf16.mxu0 0
        %431 = vmatpush1.bf16.msra.mxu0 %v412
        %432 = vmatprep.subr.bf16.mxu0 0
        %433 = vmatpush1.bf16.msra.mxu0 %v411
        %434 = vmatprep.subr.bf16.mxu0 0
        %435 = vmatpush1.bf16.msra.mxu0 %v410
        %436 = vmatprep.subr.bf16.mxu0 0
        %437 = vmatpush1.bf16.msra.mxu0 %v409
        %438 = vmatprep.subr.bf16.mxu0 0
        %439 = vmatpush1.bf16.msra.mxu0 %v408
        %440 = vmatprep.subr.bf16.mxu0 0
        %441 = vmatpush2.bf16.msra.mxu0 0
        %442 = vmatprep.subr.bf16.mxu0 0
        %443 = vmatpush2.bf16.msra.mxu0 0
        %444 = vmatprep.subr.bf16.mxu0 0
        %445 = vmatpush2.bf16.msra.mxu0 0
        %446 = vmatprep.subr.bf16.mxu0 0
        %447 = vmatpush2.bf16.msra.mxu0 0
        %448 = vmatprep.subr.bf16.mxu0 0
        %449 = vmatpush2.bf16.msra.mxu0 0
        %450 = vmatprep.subr.bf16.mxu0 0
        %451 = vmatpush2.bf16.msra.mxu0 0
        %452 = vmatprep.subr.bf16.mxu0 0
        %453 = vmatpush2.bf16.msra.mxu0 0
        %454 = vmatprep.subr.bf16.mxu0 0
        %455 = vmatpush2.bf16.msra.mxu0 0
        %456 = vmatprep.mubr.bf16.mxu0 0
        %457 = vmatmul.mubr.bf16.gmra.mxu0 %v344
        %v458 = vpop.f32.mrf.mxu0
        %v459 = vadd.f32 %v278, %v458
        %v460 = vpop.f32.mrf.mxu0
        %v461 = vpop.f32.mrf.mxu0
        %v462 = vadd.f32 %v278, %v461
        %v463 = vpop.f32.mrf.mxu0
        %464 = vmatprep.mubr.bf16.mxu0 0
        %465 = vmatmul.mubr.bf16.gmra.mxu0 %v345
        %v466 = vpop.f32.mrf.mxu0
        %v467 = vadd.f32 %v278, %v466
        %v468 = vpop.f32.mrf.mxu0
        %v469 = vpop.f32.mrf.mxu0
        %v470 = vadd.f32 %v278, %v469
        %v471 = vpop.f32.mrf.mxu0
        %472 = vmatprep.mubr.bf16.mxu0 0
        %473 = vmatmul.mubr.bf16.gmra.mxu0 %v346
        %v474 = vpop.f32.mrf.mxu0
        %v475 = vadd.f32 %v278, %v474
        %v476 = vpop.f32.mrf.mxu0
        %v477 = vpop.f32.mrf.mxu0
        %v478 = vadd.f32 %v278, %v477
        %v479 = vpop.f32.mrf.mxu0
        %480 = vmatprep.mubr.bf16.mxu0 0
        %481 = vmatmul.mubr.bf16.gmra.mxu0 %v347
        %v482 = vpop.f32.mrf.mxu0
        %v483 = vadd.f32 %v278, %v482
        %v484 = vpop.f32.mrf.mxu0
        %v485 = vpop.f32.mrf.mxu0
        %v486 = vadd.f32 %v278, %v485
        %v487 = vpop.f32.mrf.mxu0
        %488 = vmatprep.mubr.bf16.mxu0 0
        %489 = vmatmul.mubr.bf16.gmra.mxu0 %v348
        %v490 = vpop.f32.mrf.mxu0
        %v491 = vadd.f32 %v278, %v490
        %v492 = vpop.f32.mrf.mxu0
        %v493 = vpop.f32.mrf.mxu0
        %v494 = vadd.f32 %v278, %v493
        %v495 = vpop.f32.mrf.mxu0
        %496 = vmatprep.mubr.bf16.mxu0 0
        %497 = vmatmul.mubr.bf16.gmra.mxu0 %v349
        %v498 = vpop.f32.mrf.mxu0
        %v499 = vadd.f32 %v278, %v498
        %v500 = vpop.f32.mrf.mxu0
        %v501 = vpop.f32.mrf.mxu0
        %v502 = vadd.f32 %v278, %v501
        %v503 = vpop.f32.mrf.mxu0
        %504 = vmatprep.mubr.bf16.mxu0 0
        %505 = vmatmul.mubr.bf16.gmra.mxu0 %v350
        %v506 = vpop.f32.mrf.mxu0
        %v507 = vadd.f32 %v278, %v506
        %v508 = vpop.f32.mrf.mxu0
        %v509 = vpop.f32.mrf.mxu0
        %v510 = vadd.f32 %v278, %v509
        %v511 = vpop.f32.mrf.mxu0
        %512 = vmatprep.mubr.bf16.mxu0 0
        %513 = vmatmul.mubr.bf16.gmra.mxu0 %v351
        %v514 = vpop.f32.mrf.mxu0
        %v515 = vadd.f32 %v278, %v514
        %v516 = vpop.f32.mrf.mxu0
        %v517 = vpop.f32.mrf.mxu0
        %v518 = vadd.f32 %v278, %v517
        %v519 = vpop.f32.mrf.mxu0
        %520 = vmatprep.mubr.bf16.mxu0 0
        %521 = vmatmul.mubr.bf16.gmra.mxu0 %v352
        %v522 = vpop.f32.mrf.mxu0
        %v523 = vadd.f32 %v278, %v522
        %v524 = vpop.f32.mrf.mxu0
        %v525 = vpop.f32.mrf.mxu0
        %v526 = vadd.f32 %v278, %v525
        %v527 = vpop.f32.mrf.mxu0
        %528 = vmatprep.mubr.bf16.mxu0 0
        %529 = vmatmul.mubr.bf16.gmra.mxu0 %v353
        %v530 = vpop.f32.mrf.mxu0
        %v531 = vadd.f32 %v278, %v530
        %v532 = vpop.f32.mrf.mxu0
        %v533 = vpop.f32.mrf.mxu0
        %v534 = vadd.f32 %v278, %v533
        %v535 = vpop.f32.mrf.mxu0
        %536 = vmatprep.mubr.bf16.mxu0 0
        %537 = vmatmul.mubr.bf16.gmra.mxu0 %v354
        %v538 = vpop.f32.mrf.mxu0
        %v539 = vadd.f32 %v278, %v538
        %v540 = vpop.f32.mrf.mxu0
        %v541 = vpop.f32.mrf.mxu0
        %v542 = vadd.f32 %v278, %v541
        %v543 = vpop.f32.mrf.mxu0
        %544 = vmatprep.mubr.bf16.mxu0 0
        %545 = vmatmul.mubr.bf16.gmra.mxu0 %v355
        %v546 = vpop.f32.mrf.mxu0
        %v547 = vadd.f32 %v278, %v546
        %v548 = vpop.f32.mrf.mxu0
        %v549 = vpop.f32.mrf.mxu0
        %v550 = vadd.f32 %v278, %v549
        %v551 = vpop.f32.mrf.mxu0
        %552 = vmatprep.mubr.bf16.mxu0 0
        %553 = vmatmul.mubr.bf16.gmra.mxu0 %v356
        %v554 = vpop.f32.mrf.mxu0
        %v555 = vadd.f32 %v278, %v554
        %v556 = vpop.f32.mrf.mxu0
        %v557 = vpop.f32.mrf.mxu0
        %v558 = vadd.f32 %v278, %v557
        %v559 = vpop.f32.mrf.mxu0
        %560 = vmatprep.mubr.bf16.mxu0 0
        %561 = vmatmul.mubr.bf16.gmra.mxu0 %v357
        %v562 = vpop.f32.mrf.mxu0
        %v563 = vadd.f32 %v278, %v562
        %v564 = vpop.f32.mrf.mxu0
        %v565 = vpop.f32.mrf.mxu0
        %v566 = vadd.f32 %v278, %v565
        %v567 = vpop.f32.mrf.mxu0
        %568 = vmatprep.mubr.bf16.mxu0 0
        %569 = vmatmul.mubr.bf16.gmra.mxu0 %v358
        %v570 = vpop.f32.mrf.mxu0
        %v571 = vadd.f32 %v278, %v570
        %v572 = vpop.f32.mrf.mxu0
        %v573 = vpop.f32.mrf.mxu0
        %v574 = vadd.f32 %v278, %v573
        %v575 = vpop.f32.mrf.mxu0
        %576 = vmatprep.mubr.bf16.mxu0 0
        %577 = vmatmul.mubr.bf16.gmra.mxu0 %v359
        %v578 = vpop.f32.mrf.mxu0
        %v579 = vadd.f32 %v278, %v578
        %v580 = vpop.f32.mrf.mxu0
        %v581 = vpop.f32.mrf.mxu0
        %v582 = vadd.f32 %v278, %v581
        %v583 = vpop.f32.mrf.mxu0
        %584 = vdwg.mxu0
        %v585 = vmax.f32 %v459, 0.0
        %v586 = vmax.f32 %v462, 0.0
        %v587 = vmax.f32 %v467, 0.0
        %v588 = vmax.f32 %v470, 0.0
        %v589 = vmax.f32 %v475, 0.0
        %v590 = vmax.f32 %v478, 0.0
        %v591 = vmax.f32 %v483, 0.0
        %v592 = vmax.f32 %v486, 0.0
        %v593 = vmax.f32 %v491, 0.0
        %v594 = vmax.f32 %v494, 0.0
        %v595 = vmax.f32 %v499, 0.0
        %v596 = vmax.f32 %v502, 0.0
        %v597 = vmax.f32 %v507, 0.0
        %v598 = vmax.f32 %v510, 0.0
        %v599 = vmax.f32 %v515, 0.0
        %v600 = vmax.f32 %v518, 0.0
        %v601 = vmax.f32 %v523, 0.0
        %v602 = vmax.f32 %v526, 0.0
        %v603 = vmax.f32 %v531, 0.0
        %v604 = vmax.f32 %v534, 0.0
        %v605 = vmax.f32 %v539, 0.0
        %v606 = vmax.f32 %v542, 0.0
        %v607 = vmax.f32 %v547, 0.0
        %v608 = vmax.f32 %v550, 0.0
        %v609 = vmax.f32 %v555, 0.0
        %v610 = vmax.f32 %v558, 0.0
        %v611 = vmax.f32 %v563, 0.0
        %v612 = vmax.f32 %v566, 0.0
        %v613 = vmax.f32 %v571, 0.0
        %v614 = vmax.f32 %v574, 0.0
        %v615 = vmax.f32 %v579, 0.0
        %v616 = vmax.f32 %v582, 0.0
        %v617 = vpack.c.bf16 %v586, %v585
        %v618 = vpack.c.bf16 %v588, %v587
        %v619 = vpack.c.bf16 %v590, %v589
        %v620 = vpack.c.bf16 %v592, %v591
        %v621 = vpack.c.bf16 %v594, %v593
        %v622 = vpack.c.bf16 %v596, %v595
        %v623 = vpack.c.bf16 %v598, %v597
        %v624 = vpack.c.bf16 %v600, %v599
        %v625 = vpack.c.bf16 %v602, %v601
        %v626 = vpack.c.bf16 %v604, %v603
        %v627 = vpack.c.bf16 %v606, %v605
        %v628 = vpack.c.bf16 %v608, %v607
        %v629 = vpack.c.bf16 %v610, %v609
        %v630 = vpack.c.bf16 %v612, %v611
        %v631 = vpack.c.bf16 %v614, %v613
        %v632 = vpack.c.bf16 %v616, %v615
        %v649 = vunpack.c.l.b16 %v617
        %v650 = vunpack.c.h.b16 %v617
        %v651 = vunpack.c.l.b16 %v618
        %v652 = vunpack.c.h.b16 %v618
        %v653 = vunpack.c.l.b16 %v619
        %v654 = vunpack.c.h.b16 %v619
        %v655 = vunpack.c.l.b16 %v620
        %v656 = vunpack.c.h.b16 %v620
        %v657 = vunpack.c.l.b16 %v621
        %v658 = vunpack.c.h.b16 %v621
        %v659 = vunpack.c.l.b16 %v622
        %v660 = vunpack.c.h.b16 %v622
        %v661 = vunpack.c.l.b16 %v623
        %v662 = vunpack.c.h.b16 %v623
        %v663 = vunpack.c.l.b16 %v624
        %v664 = vunpack.c.h.b16 %v624
        %v665 = vunpack.c.l.b16 %v625
        %v666 = vunpack.c.h.b16 %v625
        %v667 = vunpack.c.l.b16 %v626
        %v668 = vunpack.c.h.b16 %v626
        %v669 = vunpack.c.l.b16 %v627
        %v670 = vunpack.c.h.b16 %v627
        %v671 = vunpack.c.l.b16 %v628
        %v672 = vunpack.c.h.b16 %v628
        %v673 = vunpack.c.l.b16 %v629
        %v674 = vunpack.c.h.b16 %v629
        %v675 = vunpack.c.l.b16 %v630
        %v676 = vunpack.c.h.b16 %v630
        %v677 = vunpack.c.l.b16 %v631
        %v678 = vunpack.c.h.b16 %v631
        %v679 = vunpack.c.l.b16 %v632
        %v680 = vunpack.c.h.b16 %v632
        %v681 = vpack.c.b16 %v649, %v649
        %v682 = vpack.c.b16 %v650, %v650
        %v683 = vpack.c.b16 %v651, %v651
        %v684 = vpack.c.b16 %v652, %v652
        %v685 = vpack.c.b16 %v653, %v653
        %v686 = vpack.c.b16 %v654, %v654
        %v687 = vpack.c.b16 %v655, %v655
        %v688 = vpack.c.b16 %v656, %v656
        %v689 = vpack.c.b16 %v657, %v657
        %v690 = vpack.c.b16 %v658, %v658
        %v691 = vpack.c.b16 %v659, %v659
        %v692 = vpack.c.b16 %v660, %v660
        %v693 = vpack.c.b16 %v661, %v661
        %v694 = vpack.c.b16 %v662, %v662
        %v695 = vpack.c.b16 %v663, %v663
        %v696 = vpack.c.b16 %v664, %v664
        %v697 = vpack.c.b16 %v665, %v665
        %v698 = vpack.c.b16 %v666, %v666
        %v699 = vpack.c.b16 %v667, %v667
        %v700 = vpack.c.b16 %v668, %v668
        %v701 = vpack.c.b16 %v669, %v669
        %v702 = vpack.c.b16 %v670, %v670
        %v703 = vpack.c.b16 %v671, %v671
        %v704 = vpack.c.b16 %v672, %v672
        %v705 = vpack.c.b16 %v673, %v673
        %v706 = vpack.c.b16 %v674, %v674
        %v707 = vpack.c.b16 %v675, %v675
        %v708 = vpack.c.b16 %v676, %v676
        %v709 = vpack.c.b16 %v677, %v677
        %v710 = vpack.c.b16 %v678, %v678
        %v711 = vpack.c.b16 %v679, %v679
        %v712 = vpack.c.b16 %v680, %v680
        %745 = vst [vmem:[%s221] sm:$0xf] %v681
        %746 = vst [vmem:[%s221 + $0x4] sm:$0xf] %v682
        %747 = vst [vmem:[%s221 + $0x8] sm:$0xf] %v683
        %748 = vst [vmem:[%s221 + $0xc] sm:$0xf] %v684
        %749 = vst [vmem:[%s221 + $0x10] sm:$0xf] %v685
        %750 = vst [vmem:[%s221 + $0x14] sm:$0xf] %v686
        %751 = vst [vmem:[%s221 + $0x18] sm:$0xf] %v687
        %752 = vst [vmem:[%s221 + $0x1c] sm:$0xf] %v688
        %753 = vst [vmem:[%s221 + $0x20] sm:$0xf] %v689
        %754 = vst [vmem:[%s221 + $0x24] sm:$0xf] %v690
        %755 = vst [vmem:[%s221 + $0x28] sm:$0xf] %v691
        %756 = vst [vmem:[%s221 + $0x2c] sm:$0xf] %v692
        %757 = vst [vmem:[%s221 + $0x30] sm:$0xf] %v693
        %758 = vst [vmem:[%s221 + $0x34] sm:$0xf] %v694
        %759 = vst [vmem:[%s221 + $0x38] sm:$0xf] %v695
        %760 = vst [vmem:[%s221 + $0x3c] sm:$0xf] %v696
        %761 = vst [vmem:[%s221 + $0x40] sm:$0xf] %v697
        %762 = vst [vmem:[%s221 + $0x44] sm:$0xf] %v698
        %763 = vst [vmem:[%s221 + $0x48] sm:$0xf] %v699
        %764 = vst [vmem:[%s221 + $0x4c] sm:$0xf] %v700
        %765 = vst [vmem:[%s221 + $0x50] sm:$0xf] %v701
        %766 = vst [vmem:[%s221 + $0x54] sm:$0xf] %v702
        %767 = vst [vmem:[%s221 + $0x58] sm:$0xf] %v703
        %768 = vst [vmem:[%s221 + $0x5c] sm:$0xf] %v704
        %769 = vst [vmem:[%s221 + $0x60] sm:$0xf] %v705
        %770 = vst [vmem:[%s221 + $0x64] sm:$0xf] %v706
        %771 = vst [vmem:[%s221 + $0x68] sm:$0xf] %v707
        %772 = vst [vmem:[%s221 + $0x6c] sm:$0xf] %v708
        %773 = vst [vmem:[%s221 + $0x70] sm:$0xf] %v709
        %774 = vst [vmem:[%s221 + $0x74] sm:$0xf] %v710
        %775 = vst [vmem:[%s221 + $0x78] sm:$0xf] %v711
        %776 = vst [vmem:[%s221 + $0x7c] sm:$0xf] %v712
        %s777 = sand.u32 %s113, 1
        %s778 = scalar_lea.sflag [#allocation4], %s777
        %s779 = sand.u32 %s113, 1
        %s780 = smul.addr %s779, 128
        %s781 = scalar_lea.vmem [#allocation7], %s780
        // Predicated region
        $region41: #{tpu_custom_call.1} parent=31 // pred_check
          %p782 = pneg %p123
        $region42: #{tpu_custom_call.1} parent=31 // pred_check_branch
          %784 = sbr.rel (%p782) target = $region44
        $region43: #{tpu_custom_call.1} parent=31 // pred_region
          %s785 = smul.u32 32, %s26
          %s787 = ssub.s32 2048, 2048
          %788 = vsyncadd %s778, %s787
          %s789 = smul.addr %s25, 32
          %s790 = sadd.s32 %s785, %s789
          %s791 = smul.addr %s790, 64
          %s792 = scalar_lea.hbm %s3, %s791
          %s793 = sshll.u32 %s781, 4
          %s794 = int_to_ptr.vmem [resolvable:$true] %s793
          %799 = dma.vmem_to_hbm [thread:$0]  %s794, 2048, %s792, %s778, 64, 64, 4
        $region44: #{tpu_custom_call.1} parent=31 // pred_fallthru
          _
      $region32: #{tpu_custom_call.1} parent=5 // pred_fallthru
        _
      %p800 = scmp.le.s32.totalorder 2, %s16
      // Predicated region
      $region45: #{tpu_custom_call.1} parent=5 // pred_check
        %p801 = pneg %p800
      $region46: #{tpu_custom_call.1} parent=5 // pred_check_branch
        %803 = sbr.rel (%p801) target = $region48
      $region47: #{tpu_custom_call.1} parent=5 // pred_region
        %s804 = ssub.s32 %s16, 2
        // Predicated region
        $region49: #{tpu_custom_call.1} parent=47 // pred_check
          %p805 = pneg %p129
        $region50: #{tpu_custom_call.1} parent=47 // pred_check_branch
          %807 = sbr.rel (%p805) target = $region52
        $region51: #{tpu_custom_call.1} parent=47 // pred_region
          %s808 = sand.u32 %s114, 1
          %s809 = scalar_lea.sflag [#allocation4], %s808
          %s810 = sand.u32 %s114, 1
          %s811 = smul.addr %s810, 128
          %s812 = scalar_lea.vmem [#allocation7], %s811
          %813 = dma.done %s809, 2048
        $region52: #{tpu_custom_call.1} parent=47 // pred_fallthru
          _
      $region48: #{tpu_custom_call.1} parent=5 // pred_fallthru
        _
    $region6: #{tpu_custom_call.1} parent=1 // loop_footer
      %s20 = sadd.s32 1, %s16
    $region7: #{tpu_custom_call.1} parent=1 // loop_footer_branch
      %15 = sbr.rel target = $region3
    $region8: #{tpu_custom_call.1} parent=1 // loop_exit
      _
    %814 = vsyncpa [#allocation3], 1
    %s815 = scalar_lea.sflag [#allocation3], 1
    %816 = vsyncpa %s815, 1
    %817 = vsyncpa [#allocation6], 1
    %818 = vsyncpa [#allocation4], 1
    %s819 = scalar_lea.sflag [#allocation4], 1
    %820 = vsyncpa %s819, 1

</llo_original>
